<compile_context>
chip_gen: v6e
topology: v6e:2x2x1
jax: 0.10.0
libtpu: 0.0.40
codegen_flags: <defaults>
</compile_context>

<pallas_src>
import functools

import jax
import jax.numpy as jnp
from jax.experimental import pallas as pl
from jax.experimental.pallas import tpu as pltpu


def _round_up(x, m):
    return ((x + m - 1) // m) * m


@functools.lru_cache(maxsize=1)
def _vmem_limit_bytes():
    """Per-generation scoped-VMEM limit, leaving headroom under physical VMEM."""
    try:
        phys = int(pltpu.get_tpu_info().vmem_capacity_bytes)
    except Exception:
        phys = 64 * 1024 * 1024  # conservative fallback == v7x physical VMEM
    # 3/4 of physical: ~96 MiB on v5e/v6e (128 MiB), ~48 MiB on v7x (64 MiB).
    return (phys // 4) * 3


# ---------------------------------------------------------------------------
# Kernels
# ---------------------------------------------------------------------------
def _linear_kernel_whole_k(x_ref, wt_ref, b_ref, o_ref):
    # x_ref: (tm, K), wt_ref: (K, tn), b_ref: (1, tn), o_ref: (tm, tn)
    acc = jnp.dot(x_ref[...], wt_ref[...], preferred_element_type=jnp.float32)
    o_ref[...] = (acc + b_ref[...].astype(jnp.float32)).astype(o_ref.dtype)


def _linear_kernel_kgrid_f32(x_ref, wt_ref, b_ref, o_ref):
    # f32 output: accumulate directly into the resident output block
    # (its index_map ignores k), no scratch and no finalize copy.
    k = pl.program_id(2)

    @pl.when(k == 0)
    def _init():
        o_ref[...] = jnp.broadcast_to(b_ref[...].astype(jnp.float32), o_ref.shape)

    o_ref[...] += jnp.dot(x_ref[...], wt_ref[...],
                          preferred_element_type=jnp.float32)


def _linear_kernel_kgrid_acc(x_ref, wt_ref, b_ref, o_ref, acc_ref):
    # General-dtype output: f32 accumulator scratch, bias folded into init.
    k = pl.program_id(2)

    @pl.when(k == 0)
    def _init():
        acc_ref[...] = jnp.broadcast_to(b_ref[...].astype(jnp.float32),
                                        acc_ref.shape)

    acc_ref[...] += jnp.dot(x_ref[...], wt_ref[...],
                            preferred_element_type=jnp.float32)

    @pl.when(k == pl.num_programs(2) - 1)
    def _finalize():
        o_ref[...] = acc_ref[...].astype(o_ref.dtype)


# ---------------------------------------------------------------------------
# Tile / grid selection
# ---------------------------------------------------------------------------
def _choose_config(B, IN, OUT, xb, wb, ob, budget):
    """Pick (tm, tn, tk, whole_k). All candidates satisfy the (8,128) rule:
    tiles are either multiples of (8, 128) or equal to the full array dim."""
    tm_cands = ([B] if B <= 1024 else []) + \
        [t for t in (1024, 512, 256, 128, 64, 32, 16, 8) if t < B]
    if not tm_cands:
        tm_cands = [B]
    tn_cands = ([OUT] if OUT <= 1024 else []) + \
        [t for t in (1024, 512, 256, 128) if t < OUT]
    if not tn_cands:
        tn_cands = [OUT]

    def live(tm, tn, tk, scratch):
        # double-buffered x + W + bias tiles + output block (+ optional acc)
        return (2 * (tm * tk * xb + tk * tn * wb + tn * 4 + tm * tn * ob)
                + (tm * tn * 4 if scratch else 0))

    # Preferred: one whole-K strip per output tile -> single dot, no K axis.
    for tm in tm_cands:
        for tn in tn_cands:
            if live(tm, tn, IN, False) <= budget:
                return tm, tn, IN, True

    # Fallback: tiled K with the largest K tile that fits.
    for tk in (4096, 2048, 1024, 512, 256, 128):
        for tm in tm_cands:
            for tn in tn_cands:
                if live(tm, tn, tk, True) <= budget:
                    return tm, tn, tk, False
    return tm_cands[-1], tn_cands[-1], 128, False


# ---------------------------------------------------------------------------
# Wrapper (PyTorch nn.Linear semantics)
# ---------------------------------------------------------------------------
@functools.partial(jax.jit, static_argnames=("compute_dtype",))
def linear_forward(x, weight, bias, compute_dtype=None):
    """y = x @ weight.T + bias.  x: (..., IN), weight: (OUT, IN), bias: (OUT,)."""
    *lead, IN = x.shape
    OUT, IN_w = weight.shape
    assert IN == IN_w, "weight.shape[1] must equal x.shape[-1]"

    x2 = x.reshape(-1, IN)
    B = x2.shape[0]
    out_dtype = x.dtype

    # One-time re-layout of the PyTorch (OUT, IN) weight to (IN, OUT) so the
    # kernel is a plain MXU-native A(m,k)@B(k,n) dot, no in-kernel relayout.
    # TODO(synk): in a real training loop keep the weight persistently in
    # (IN, OUT) layout to avoid this per-call HBM transpose.
    wt = weight.T
    b2 = bias.reshape(1, OUT)

    if compute_dtype is not None:
        x2 = x2.astype(compute_dtype)
        wt = wt.astype(compute_dtype)

    xb = jnp.dtype(x2.dtype).itemsize
    wb = jnp.dtype(wt.dtype).itemsize
    ob = jnp.dtype(out_dtype).itemsize

    vmem_limit = _vmem_limit_bytes()
    budget = int(vmem_limit * 0.8)
    tm, tn, tk, whole_k = _choose_config(B, IN, OUT, xb, wb, ob, budget)

    if whole_k:
        # No K grid axis: ragged M / N edges handled by cdiv grid + masked
        # edge stores; no padding of any kind.
        grid = (pl.cdiv(B, tm), pl.cdiv(OUT, tn))
        out = pl.pallas_call(
            _linear_kernel_whole_k,
            out_shape=jax.ShapeDtypeStruct((B, OUT), out_dtype),
            grid=grid,
            in_specs=[
                pl.BlockSpec((tm, IN), lambda i, j: (i, 0)),   # x strip
                pl.BlockSpec((IN, tn), lambda i, j: (0, j)),   # weight strip
                pl.BlockSpec((1, tn), lambda i, j: (0, j)),    # bias
            ],
            out_specs=pl.BlockSpec((tm, tn), lambda i, j: (i, j)),
            compiler_params=pltpu.CompilerParams(
                dimension_semantics=("parallel", "parallel"),
                vmem_limit_bytes=vmem_limit,
            ),
        )(x2, wt, b2)
    else:
        # Tiled-K reduction: only K is zero-padded (needed for correctness of
        # the accumulation); M / N stay ragged via cdiv grids.
        Kp = _round_up(IN, tk)
        if Kp != IN:
            x2 = jnp.pad(x2, ((0, 0), (0, Kp - IN)))
            wt = jnp.pad(wt, ((0, Kp - IN), (0, 0)))
        grid = (pl.cdiv(B, tm), pl.cdiv(OUT, tn), Kp // tk)
        f32_out = jnp.dtype(out_dtype) == jnp.dtype(jnp.float32)
        kernel = _linear_kernel_kgrid_f32 if f32_out else _linear_kernel_kgrid_acc
        scratch = [] if f32_out else [pltpu.VMEM((tm, tn), jnp.float32)]
        out = pl.pallas_call(
            kernel,
            out_shape=jax.ShapeDtypeStruct((B, OUT), out_dtype),
            grid=grid,
            in_specs=[
                pl.BlockSpec((tm, tk), lambda i, j, k: (i, k)),
                pl.BlockSpec((tk, tn), lambda i, j, k: (k, j)),
                pl.BlockSpec((1, tn), lambda i, j, k: (0, j)),
            ],
            out_specs=pl.BlockSpec((tm, tn), lambda i, j, k: (i, j)),
            scratch_shapes=scratch,
            compiler_params=pltpu.CompilerParams(
                dimension_semantics=("parallel", "parallel", "arbitrary"),
                vmem_limit_bytes=vmem_limit,
            ),
        )(x2, wt, b2)

    return out.reshape(*lead, OUT)


if __name__ == "__main__":
    # Small shapes consistent with LinearRegressionTorch(input_size, output_size).
    batch, input_size, output_size = 8, 32, 16

    key = jax.random.PRNGKey(0)
    kx, kw, kb = jax.random.split(key, 3)

    x = jax.random.normal(kx, (batch, input_size), dtype=jnp.float32)
    # Deterministic init mimicking nn.Linear's uniform(-1/sqrt(in), 1/sqrt(in)).
    bound = 1.0 / (input_size ** 0.5)
    weight = jax.random.uniform(
        kw, (output_size, input_size), minval=-bound, maxval=bound,
        dtype=jnp.float32)
    bias = jax.random.uniform(
        kb, (output_size,), minval=-bound, maxval=bound, dtype=jnp.float32)

    y = linear_forward(x, weight, bias)
    y = jax.block_until_ready(y)

    # Correctness check against plain-JAX reference.
    y_ref = x @ weight.T + bias
    assert y.shape == (batch, output_size)
    assert jnp.allclose(y, y_ref, atol=1e-5, rtol=1e-5), \
        float(jnp.max(jnp.abs(y - y_ref)))

    print("KERNEL_OK")
</pallas_src>

<mosaic_0001>
module attributes {stable_mosaic.version = 11 : i64} {
  func.func @_linear_kernel_whole_k(%arg0: i32, %arg1: i32, %arg2: memref<8x32xf32, #tpu.memory_space<vmem>>, %arg3: memref<32x16xf32, #tpu.memory_space<vmem>>, %arg4: memref<1x16xf32, #tpu.memory_space<vmem>>, %arg5: memref<8x16xf32, #tpu.memory_space<vmem>>) attributes {dimension_semantics = [#tpu.dimension_semantics<parallel>, #tpu.dimension_semantics<parallel>], iteration_bounds = array<i64: 1, 1>, scalar_prefetch = 0 : i64, scratch_operands = 0 : i64, tpu.core_type = #tpu.core_type<tc>, window_params = [{transform_indices = @transform_0, window_bounds = array<i64: 8, 32>}, {transform_indices = @transform_1, window_bounds = array<i64: 32, 16>}, {transform_indices = @transform_2, window_bounds = array<i64: 1, 16>}, {transform_indices = @transform_3, window_bounds = array<i64: 8, 16>}]} {
    %c0 = arith.constant 0 : index
    %c0_0 = arith.constant 0 : index
    %0 = vector.load %arg2[%c0, %c0_0] : memref<8x32xf32, #tpu.memory_space<vmem>>, vector<8x32xf32>
    %c0_1 = arith.constant 0 : index
    %c0_2 = arith.constant 0 : index
    %1 = vector.load %arg3[%c0_1, %c0_2] : memref<32x16xf32, #tpu.memory_space<vmem>>, vector<32x16xf32>
    %cst = arith.constant dense<0.000000e+00> : vector<8x16xf32>
    %2 = tpu.matmul %0, %1, %cst {dimension_numbers = #tpu.dot_dimension_numbers<[1], [0], [0], [1], [0, 0, 1, 1], [], []>} : vector<8x32xf32>, vector<32x16xf32>, vector<8x16xf32> -> vector<8x16xf32>
    %c0_3 = arith.constant 0 : index
    %c0_4 = arith.constant 0 : index
    %3 = vector.load %arg4[%c0_3, %c0_4] : memref<1x16xf32, #tpu.memory_space<vmem>>, vector<1x16xf32>
    %4 = vector.broadcast %3 : vector<1x16xf32> to vector<8x16xf32>
    %5 = arith.addf %2, %4 : vector<8x16xf32>
    %c0_5 = arith.constant 0 : index
    %c0_6 = arith.constant 0 : index
    %6 = vector.load %arg5[%c0_5, %c0_6] : memref<8x16xf32, #tpu.memory_space<vmem>>, vector<8x16xf32>
    tpu.vector_store %arg5[%c0_5, %c0_6], %5 {strides = array<i32>} : memref<8x16xf32, #tpu.memory_space<vmem>>, vector<8x16xf32>,
    return
  }
  func.func @transform_0(%arg0: i32, %arg1: i32) -> (i32, i32) {
    %c0_i32 = arith.constant 0 : i32
    %c0_i32_0 = arith.constant 0 : i32
    return %arg0, %c0_i32 : i32, i32
  }
  func.func @transform_1(%arg0: i32, %arg1: i32) -> (i32, i32) {
    %c0_i32 = arith.constant 0 : i32
    %c0_i32_0 = arith.constant 0 : i32
    return %c0_i32, %arg1 : i32, i32
  }
  func.func @transform_2(%arg0: i32, %arg1: i32) -> (i32, i32) {
    %c0_i32 = arith.constant 0 : i32
    %c0_i32_0 = arith.constant 0 : i32
    return %c0_i32, %arg1 : i32, i32
  }
  func.func @transform_3(%arg0: i32, %arg1: i32) -> (i32, i32) {
    %c0_i32 = arith.constant 0 : i32
    return %arg0, %arg1 : i32, i32
  }
}

</mosaic_0001>

<llo_original>
// kernel: linear_forward.1
$region0: #{linear_forward.1}
  #allocation0 [shape = 'u32[]', space=smem, size = 0x4, offset = 0x4, fixed_abs, tag = 'smem constant byte address 0x4 - core index']
  #allocation1 [shape = 'u32[144,128]{1,0:T(1,128)}', space=vmem, size = 0x12000, scoped, tag = 'internal scratch']
  %s0 = inlined_call_operand.vmem [shape: f32[8,32], index: 0, kind: input, shape index: {}]
  %s1 = inlined_call_operand.vmem [shape: f32[32,16], index: 1, kind: input, shape index: {}]
  %s2 = inlined_call_operand.vmem [shape: f32[1,16], index: 2, kind: input, shape index: {}]
  %s3 = inlined_call_operand.hbm [shape: f32[8,16], index: 3, kind: output, shape index: {}]
  %s4 = sld [smem:[#allocation0]]
  $region22: #{linear_forward.1} parent=0
    _
  %s6 = ssub.s32 1, %s4
  %s7 = scalar_select 0, %s6, %s4
  $region1: #{linear_forward.1} parent=0
    #allocation2 [shape = 'u8[4096]{0}', space=vmem, size = 0x1000, scoped, tag = 'output window, operand 0, single buffered']
    #allocation3 [shape = 's32[1]{0}', space=sflag, size = 0x4, scoped, tag = 'scoped memory for linear_forward.1']
    %8 = vsyncpa [#allocation3], 0
    // Predicated region
    $region2: #{linear_forward.1} parent=1 // pred_check
      _
    $region3: #{linear_forward.1} parent=1 // pred_check_branch
      %10 = sbr.rel (0) target = $region5
    $region4: #{linear_forward.1} parent=1 // pred_region
      _
    $region5: #{linear_forward.1} parent=1 // pred_fallthru
      _
    // Predicated region
    $region6: #{linear_forward.1} parent=1 // pred_check
      _
    $region7: #{linear_forward.1} parent=1 // pred_check_branch
      %12 = sbr.rel (0) target = $region9
    $region8: #{linear_forward.1} parent=1 // pred_region
      _
    $region9: #{linear_forward.1} parent=1 // pred_fallthru
      _
    // Predicated region
    $region10: #{linear_forward.1} parent=1 // pred_check
      _
    $region11: #{linear_forward.1} parent=1 // pred_check_branch
      %14 = sbr.rel (0) target = $region13
    $region12: #{linear_forward.1} parent=1 // pred_region
      _
    $region13: #{linear_forward.1} parent=1 // pred_fallthru
      _
    %v15 = vld [vmem:[%s0] sm:$0xff]
    %v16 = vld [vmem:[%s1] sm:$0xff]
    %v17 = vld [vmem:[%s1 + $0x8] sm:$0xff]
    %v18 = vld [vmem:[%s1 + $0x10] sm:$0xff]
    %v19 = vld [vmem:[%s1 + $0x18] sm:$0xff]
    %v20 = vld [vmem:[%s2] sm:$0x1]
    %v22 = vlaneseq
    %v23 = vshrl.u32 %v22, 7
    %v24 = vsub.s32 0, %v23
    %v25 = vrot.slane %v20, %v24
    %vm27 = vcmask 261120
    %v29 = vsel %vm27, %v15, 0
    %31 = vmatprep.subr.mxu0 0.0
    %32 = vmatpush1.msra.mxu0 0.0
    %33 = vmatprep.subr.mxu0 0.0
    %34 = vmatpush1.msra.mxu0 0.0
    %35 = vmatprep.subr.mxu0 0.0
    %36 = vmatpush1.msra.mxu0 0.0
    %37 = vmatprep.subr.mxu0 0.0
    %38 = vmatpush1.msra.mxu0 0.0
    %39 = vmatprep.subr.mxu0 0.0
    %40 = vmatpush1.msra.mxu0 0.0
    %41 = vmatprep.subr.mxu0 0.0
    %42 = vmatpush1.msra.mxu0 0.0
    %43 = vmatprep.subr.mxu0 0.0
    %44 = vmatpush1.msra.mxu0 0.0
    %45 = vmatprep.subr.mxu0 0.0
    %46 = vmatpush1.msra.mxu0 0.0
    %47 = vmatprep.subr.mxu0 0.0
    %48 = vmatpush1.msra.mxu0 0.0
    %49 = vmatprep.subr.mxu0 0.0
    %50 = vmatpush1.msra.mxu0 0.0
    %51 = vmatprep.subr.mxu0 0.0
    %52 = vmatpush1.msra.mxu0 0.0
    %53 = vmatprep.subr.mxu0 0.0
    %54 = vmatpush1.msra.mxu0 0.0
    %55 = vmatprep.subr.mxu0 0.0
    %56 = vmatpush1.msra.mxu0 %v19
    %57 = vmatprep.subr.mxu0 0.0
    %58 = vmatpush1.msra.mxu0 %v18
    %59 = vmatprep.subr.mxu0 0.0
    %60 = vmatpush1.msra.mxu0 %v17
    %61 = vmatprep.subr.mxu0 0.0
    %62 = vmatpush1.msra.mxu0 %v16
    %63 = vmatprep.subr.mxu0 0.0
    %64 = vmatpush2.msra.mxu0 0.0
    %65 = vmatprep.subr.mxu0 0.0
    %66 = vmatpush2.msra.mxu0 0.0
    %67 = vmatprep.subr.mxu0 0.0
    %68 = vmatpush2.msra.mxu0 0.0
    %69 = vmatprep.subr.mxu0 0.0
    %70 = vmatpush2.msra.mxu0 0.0
    %71 = vmatprep.subr.mxu0 0.0
    %72 = vmatpush2.msra.mxu0 0.0
    %73 = vmatprep.subr.mxu0 0.0
    %74 = vmatpush2.msra.mxu0 0.0
    %75 = vmatprep.subr.mxu0 0.0
    %76 = vmatpush2.msra.mxu0 0.0
    %77 = vmatprep.subr.mxu0 0.0
    %78 = vmatpush2.msra.mxu0 0.0
    %79 = vmatprep.subr.mxu0 0.0
    %80 = vmatpush2.msra.mxu0 0.0
    %81 = vmatprep.subr.mxu0 0.0
    %82 = vmatpush2.msra.mxu0 0.0
    %83 = vmatprep.subr.mxu0 0.0
    %84 = vmatpush2.msra.mxu0 0.0
    %85 = vmatprep.subr.mxu0 0.0
    %86 = vmatpush2.msra.mxu0 0.0
    %87 = vmatprep.subr.mxu0 0.0
    %88 = vmatpush2.msra.mxu0 0.0
    %89 = vmatprep.subr.mxu0 0.0
    %90 = vmatpush2.msra.mxu0 0.0
    %91 = vmatprep.subr.mxu0 0.0
    %92 = vmatpush2.msra.mxu0 0.0
    %93 = vmatprep.subr.mxu0 0.0
    %94 = vmatpush2.msra.mxu0 0.0
    %95 = vmatprep.mubr.f32.mxu0 0.0
    %96 = vmatmul.mubr.f32.gmra.mxu0 %v29
    %v97 = vpop.f32.mrf.mxu0
    %v98 = vadd.f32 %v25, %v97
    %v99 = vpop.f32.mrf.mxu0
    %100 = vdwg.mxu0
    %vm101 = vcmask 130048
    %102 = vst.msk [vmem:[#allocation2] sm:$0xff] %vm101, %v98
    // Predicated region
    $region14: #{linear_forward.1} parent=1 // pred_check
      _
    $region15: #{linear_forward.1} parent=1 // pred_check_branch
      %104 = sbr.rel (0) target = $region17
    $region16: #{linear_forward.1} parent=1 // pred_region
      %s106 = ssub.s32 128, 128
      %107 = vsyncadd [#allocation3], %s106
      %s109 = sshll.u32 [#allocation2], 4
      %s110 = int_to_ptr.vmem [resolvable:$true] %s109
      %112 = dma.vmem_to_hbm [thread:$0]  %s110, 128, %s3, [#allocation3]
    $region17: #{linear_forward.1} parent=1 // pred_fallthru
      _
    // Predicated region
    $region18: #{linear_forward.1} parent=1 // pred_check
      _
    $region19: #{linear_forward.1} parent=1 // pred_check_branch
      %114 = sbr.rel (0) target = $region21
    $region20: #{linear_forward.1} parent=1 // pred_region
      %115 = dma.done [#allocation3], 128
    $region21: #{linear_forward.1} parent=1 // pred_fallthru
      _
    %116 = vsyncpa [#allocation3], 1

</llo_original>
